<compile_context>
chip_gen: v5e
topology: v5e:2x2
jax: 0.10.0
libtpu: 0.0.40
codegen_flags: <defaults>
</compile_context>

<pallas_src>
import jax
import jax.numpy as jnp
from jax import lax
from jax.experimental import pallas as pl
from jax.experimental.pallas import tpu as pltpu


# --------------------------------------------------------------------------- #
# Pallas kernels
# --------------------------------------------------------------------------- #
def lstm_recurrence_kernel(gx_ref, whh_ref, h_out_ref, h_sc, c_sc):
    """One grid step == one LSTM time step (sequential recurrence only).

    gx_ref   : (1, Bp, 4Hp) f32  precomputed x @ W_ih + b for this step
    whh_ref  : (Hp, 4Hp)    bf16 hidden->gates weight (transposed, gate-padded)
    h_out_ref: (1, Bp, Hp)  bf16 hidden state emitted for this step
    h_sc,c_sc: (Bp, Hp)     f32  VMEM scratch carrying state across the grid
    """
    t = pl.program_id(0)

    @pl.when(t == 0)
    def _():
        h_sc[...] = jnp.zeros_like(h_sc)
        c_sc[...] = jnp.zeros_like(c_sc)

    Hp = h_sc.shape[-1]
    h_prev = h_sc[...]
    c_prev = c_sc[...]

    gates = gx_ref[0] + jnp.dot(h_prev.astype(whh_ref.dtype), whh_ref[...],
                                preferred_element_type=jnp.float32)  # (Bp, 4Hp)

    # Lane-aligned gate slices (Hp is a multiple of 128).
    i_g = jax.nn.sigmoid(gates[:, 0 * Hp:1 * Hp])
    f_g = jax.nn.sigmoid(gates[:, 1 * Hp:2 * Hp])
    g_g = jnp.tanh(gates[:, 2 * Hp:3 * Hp])
    o_g = jax.nn.sigmoid(gates[:, 3 * Hp:4 * Hp])

    c_new = f_g * c_prev + i_g * g_g
    h_new = o_g * jnp.tanh(c_new)
    c_sc[...] = c_new
    h_sc[...] = h_new
    h_out_ref[0] = h_new.astype(h_out_ref.dtype)


def vocab_logsoftmax_kernel(h_ref, wout_ref, bout_ref, out_ref):
    """Embarrassingly-parallel vocab projection + log_softmax for a row block.

    h_ref   : (block_rows, Hp) bf16
    wout_ref: (Hp, V)          bf16
    bout_ref: (1, V)           f32
    out_ref : (block_rows, V)  f32 log-probabilities
    """
    logits = (jnp.dot(h_ref[...], wout_ref[...],
                      preferred_element_type=jnp.float32)
              + bout_ref[...])                               # (block_rows, V)
    m = jnp.max(logits, axis=-1, keepdims=True)
    shifted = logits - m
    lse = jnp.log(jnp.sum(jnp.exp(shifted), axis=-1, keepdims=True))
    out_ref[...] = (shifted - lse).astype(out_ref.dtype)


# --------------------------------------------------------------------------- #
# Wrapper
# --------------------------------------------------------------------------- #
def _round_up(x, m):
    return ((x + m - 1) // m) * m


def _pad_gate_cols(w, H, Hp):
    """(rows, 4H) -> (rows, 4Hp): zero-pad each gate's column block to Hp lanes."""
    if Hp == H:
        return w
    parts = [w[:, k * H:(k + 1) * H] for k in range(4)]
    return jnp.concatenate([jnp.pad(p, ((0, 0), (0, Hp - H))) for p in parts],
                           axis=1)


def decoder_rnn_forward(features, captions, params, mm_dtype=jnp.bfloat16):
    """Forward pass equivalent to DecoderRNN.forward (dropout in eval mode)."""
    emb_w = params["embedding"]          # (V, E) f32
    wih = params["w_ih"]                 # (E, 4H)
    whh = params["w_hh"]                 # (H, 4H)
    b = params["b"]                      # (1, 4H)  (= b_ih + b_hh)
    wout = params["w_out"]               # (H, V)
    bout = params["b_out"]               # (1, V)

    B, E = features.shape
    T = captions.shape[1]                # time steps after the [:, :-1] trim
    H = whh.shape[0]
    V = wout.shape[1]

    Bp = _round_up(max(B, 8), 8)         # sublane-align the batch
    Hp = _round_up(H, 128)               # lane-align each gate block

    # ---- glue (plain JAX): time-major input without an activation transpose --
    cap_tm = captions[:, :T - 1].T                       # (T-1, B) int32 (cheap)
    emb_tm = jnp.take(emb_w, cap_tm, axis=0)             # (T-1, B, E)
    # TODO(synk): training-mode dropout not reproduced (eval-mode identity).
    x_tm = jnp.concatenate([features[None], emb_tm], axis=0)   # (T, B, E) f32
    x_tm = jnp.pad(x_tm, ((0, 0), (0, Bp - B), (0, 0)))        # (T, Bp, E)

    # ---- pad weights (zero padding is exact: padded h/c columns stay 0) ------
    wih_p = _pad_gate_cols(wih, H, Hp)                               # (E, 4Hp)
    whh_p = jnp.pad(_pad_gate_cols(whh, H, Hp), ((0, Hp - H), (0, 0)))  # (Hp,4Hp)
    b_p = _pad_gate_cols(b, H, Hp)                                   # (1, 4Hp)
    wout_p = jnp.pad(wout, ((0, Hp - H), (0, 0)))                    # (Hp, V)

    wih_mm = wih_p.astype(mm_dtype)
    whh_mm = whh_p.astype(mm_dtype)
    wout_mm = wout_p.astype(mm_dtype)
    bout_f32 = bout.astype(jnp.float32)

    # ---- hoisted input->gates projection: ONE big MXU matmul (XLA) -----------
    gx = (jnp.dot(x_tm.reshape(T * Bp, E).astype(mm_dtype), wih_mm,
                  preferred_element_type=jnp.float32)
          + b_p).reshape(T, Bp, 4 * Hp)                              # f32

    # ---- Pallas #1: sequential LSTM recurrence -> h_all (T, Bp, Hp) ----------
    rec_cost = pl.CostEstimate(
        flops=int(2 * T * Bp * Hp * 4 * Hp),
        transcendentals=int(5 * T * Bp * Hp),
        bytes_accessed=int(gx.size * 4 + whh_mm.size * whh_mm.dtype.itemsize
                           + T * Bp * Hp * jnp.dtype(mm_dtype).itemsize))
    h_all = pl.pallas_call(
        lstm_recurrence_kernel,
        out_shape=jax.ShapeDtypeStruct((T, Bp, Hp), mm_dtype),
        grid_spec=pltpu.PrefetchScalarGridSpec(
            num_scalar_prefetch=0,
            grid=(T,),
            in_specs=[
                pl.BlockSpec((1, Bp, 4 * Hp), lambda t: (t, 0, 0)),
                pl.BlockSpec((Hp, 4 * Hp), lambda t: (0, 0)),
            ],
            out_specs=pl.BlockSpec((1, Bp, Hp), lambda t: (t, 0, 0)),
            scratch_shapes=[
                pltpu.VMEM((Bp, Hp), jnp.float32),   # h state
                pltpu.VMEM((Bp, Hp), jnp.float32),   # c state
            ],
        ),
        compiler_params=pltpu.CompilerParams(
            dimension_semantics=("arbitrary",),      # true serial recurrence
            vmem_limit_bytes=64 * 1024 * 1024),
        cost_estimate=rec_cost,
    )(gx, whh_mm)

    # ---- Pallas #2: big vocab projection + log_softmax (parallel) ------------
    # Arrange rows as (b, t) so the large (.., V) output never needs a transpose;
    # only the small H-wide hidden tensor is transposed.
    h_bt = jnp.transpose(h_all, (1, 0, 2)).reshape(Bp * T, Hp)       # (rows, Hp)
    rows = Bp * T
    block_rows = min(rows, 256)
    while rows % block_rows:
        block_rows -= 8

    proj_cost = pl.CostEstimate(
        flops=int(2 * rows * Hp * V),
        transcendentals=int(rows * V),
        bytes_accessed=int(rows * Hp * jnp.dtype(mm_dtype).itemsize
                           + Hp * V * jnp.dtype(mm_dtype).itemsize
                           + rows * V * 4))
    logp = pl.pallas_call(
        vocab_logsoftmax_kernel,
        out_shape=jax.ShapeDtypeStruct((rows, V), jnp.float32),
        grid_spec=pltpu.PrefetchScalarGridSpec(
            num_scalar_prefetch=0,
            grid=(rows // block_rows,),
            in_specs=[
                pl.BlockSpec((block_rows, Hp), lambda r: (r, 0)),
                pl.BlockSpec((Hp, V), lambda r: (0, 0)),
                pl.BlockSpec((1, V), lambda r: (0, 0)),
            ],
            out_specs=pl.BlockSpec((block_rows, V), lambda r: (r, 0)),
        ),
        compiler_params=pltpu.CompilerParams(
            dimension_semantics=("parallel",),       # shardable across TCs
            vmem_limit_bytes=64 * 1024 * 1024),
        cost_estimate=proj_cost,
    )(h_bt, wout_mm, bout_f32)

    return logp.reshape(Bp, T, V)[:B]                # (B, T, V)


# --------------------------------------------------------------------------- #
# Pure-JAX reference (PyTorch semantics, same bf16 matmul policy) for validation
# --------------------------------------------------------------------------- #
def reference_forward(features, captions, params, mm_dtype=jnp.bfloat16):
    emb_w = params["embedding"]
    wih, whh, b = params["w_ih"], params["w_hh"], params["b"]
    wout, bout = params["w_out"], params["b_out"]
    H = whh.shape[0]

    embedded = jnp.take(emb_w, captions, axis=0)
    lstm_input = jnp.concatenate([features[:, None, :], embedded], axis=1)[:, :-1, :]
    B = lstm_input.shape[0]
    x_tm = jnp.transpose(lstm_input, (1, 0, 2))               # (T, B, E)

    wih_mm = wih.astype(mm_dtype)
    whh_mm = whh.astype(mm_dtype)
    wout_mm = wout.astype(mm_dtype)

    gx_all = jnp.dot(x_tm.astype(mm_dtype), wih_mm,
                     preferred_element_type=jnp.float32) + b  # (T, B, 4H)

    def step(carry, gx_t):
        h, c = carry
        gates = gx_t + jnp.dot(h.astype(mm_dtype), whh_mm,
                               preferred_element_type=jnp.float32)
        i_g = jax.nn.sigmoid(gates[:, 0 * H:1 * H])
        f_g = jax.nn.sigmoid(gates[:, 1 * H:2 * H])
        g_g = jnp.tanh(gates[:, 2 * H:3 * H])
        o_g = jax.nn.sigmoid(gates[:, 3 * H:4 * H])
        c_new = f_g * c + i_g * g_g
        h_new = o_g * jnp.tanh(c_new)
        return (h_new, c_new), h_new

    h0 = jnp.zeros((B, H), jnp.float32)
    c0 = jnp.zeros((B, H), jnp.float32)
    _, h_all = lax.scan(step, (h0, c0), gx_all)               # (T, B, H) f32
    logits = jnp.dot(h_all.astype(mm_dtype), wout_mm,
                     preferred_element_type=jnp.float32) + bout
    out = jax.nn.log_softmax(logits, axis=-1)
    return jnp.transpose(out, (1, 0, 2))                      # (B, T, V)


# --------------------------------------------------------------------------- #
# Params + demo
# --------------------------------------------------------------------------- #
def make_params(key, embed_size, hidden_size, vocab_size):
    ks = jax.random.split(key, 7)
    scale = 0.1
    emb = scale * jax.random.normal(ks[0], (vocab_size, embed_size), jnp.float32)
    # PyTorch LSTM weights are (4H, E)/(4H, H); store transposed for x @ W.
    w_ih = scale * jax.random.normal(ks[1], (embed_size, 4 * hidden_size), jnp.float32)
    w_hh = scale * jax.random.normal(ks[2], (hidden_size, 4 * hidden_size), jnp.float32)
    b_ih = scale * jax.random.normal(ks[3], (4 * hidden_size,), jnp.float32)
    b_hh = scale * jax.random.normal(ks[4], (4 * hidden_size,), jnp.float32)
    # PyTorch Linear weight is (V, H); store transposed (H, V).
    w_out = scale * jax.random.normal(ks[5], (hidden_size, vocab_size), jnp.float32)
    b_out = scale * jax.random.normal(ks[6], (vocab_size,), jnp.float32)
    return {
        "embedding": emb,
        "w_ih": w_ih,
        "w_hh": w_hh,
        "b": (b_ih + b_hh)[None, :],
        "w_out": w_out,
        "b_out": b_out[None, :],
    }


if __name__ == "__main__":
    B, T_cap = 2, 8
    embed_size, hidden_size, vocab_size = 32, 32, 128

    key = jax.random.PRNGKey(0)
    k_p, k_f, k_c = jax.random.split(key, 3)

    params = make_params(k_p, embed_size, hidden_size, vocab_size)
    features = jax.random.normal(k_f, (B, embed_size), jnp.float32)
    captions = jax.random.randint(k_c, (B, T_cap), 0, vocab_size, jnp.int32)

    out = decoder_rnn_forward(features, captions, params)
    out = jax.block_until_ready(out)

    ref = reference_forward(features, captions, params)
    assert out.shape == (B, T_cap, vocab_size)
    assert jnp.allclose(out, ref, atol=2e-3, rtol=2e-3), "mismatch vs reference"

    print("KERNEL_OK")
</pallas_src>

<mosaic_0001>
module attributes {stable_mosaic.version = 11 : i64} {
  func.func @lstm_recurrence_kernel(%arg0: i32, %arg1: memref<1x8x512xf32, #tpu.memory_space<vmem>>, %arg2: memref<128x512xbf16, #tpu.memory_space<vmem>>, %arg3: memref<1x8x128xbf16, #tpu.memory_space<vmem>>, %arg4: memref<8x128xf32, #tpu.memory_space<vmem>>, %arg5: memref<8x128xf32, #tpu.memory_space<vmem>>) attributes {dimension_semantics = [#tpu.dimension_semantics<arbitrary>], iteration_bounds = array<i64: 8>, scalar_prefetch = 0 : i64, scratch_operands = 2 : i64, tpu.core_type = #tpu.core_type<tc>, window_params = [{transform_indices = @transform_0, window_bounds = array<i64: 1, 8, 512>}, {pipeline_mode = #tpu.pipeline_mode<synchronous>, transform_indices = @transform_1, window_bounds = array<i64: 128, 512>}, {transform_indices = @transform_2, window_bounds = array<i64: 1, 8, 128>}]} {
    %c0_i32 = arith.constant 0 : i32
    %0 = arith.cmpi eq, %arg0, %c0_i32 : i32
    %1 = arith.extui %0 : i1 to i32
    %c0_i32_0 = arith.constant 0 : i32
    %2 = arith.cmpi ne, %1, %c0_i32_0 : i32
    scf.if %2 {
      %cst_19 = arith.constant 0.000000e+00 : f32
      %42 = vector.broadcast %cst_19 : f32 to vector<8x128xf32>
      %c0_20 = arith.constant 0 : index
      %c0_21 = arith.constant 0 : index
      %43 = vector.load %arg4[%c0_20, %c0_21] : memref<8x128xf32, #tpu.memory_space<vmem>>, vector<8x128xf32>
      tpu.vector_store %arg4[%c0_20, %c0_21], %42 {strides = array<i32>} : memref<8x128xf32, #tpu.memory_space<vmem>>, vector<8x128xf32>,
      %cst_22 = arith.constant 0.000000e+00 : f32
      %44 = vector.broadcast %cst_22 : f32 to vector<8x128xf32>
      %c0_23 = arith.constant 0 : index
      %c0_24 = arith.constant 0 : index
      %45 = vector.load %arg5[%c0_23, %c0_24] : memref<8x128xf32, #tpu.memory_space<vmem>>, vector<8x128xf32>
      tpu.vector_store %arg5[%c0_23, %c0_24], %44 {strides = array<i32>} : memref<8x128xf32, #tpu.memory_space<vmem>>, vector<8x128xf32>,
    } else {
    }
    %c0 = arith.constant 0 : index
    %c0_1 = arith.constant 0 : index
    %3 = vector.load %arg4[%c0, %c0_1] : memref<8x128xf32, #tpu.memory_space<vmem>>, vector<8x128xf32>
    %c0_2 = arith.constant 0 : index
    %c0_3 = arith.constant 0 : index
    %4 = vector.load %arg5[%c0_2, %c0_3] : memref<8x128xf32, #tpu.memory_space<vmem>>, vector<8x128xf32>
    %c0_4 = arith.constant 0 : index
    %c0_5 = arith.constant 0 : index
    %c0_6 = arith.constant 0 : index
    %5 = vector.load %arg1[%c0_4, %c0_5, %c0_6] : memref<1x8x512xf32, #tpu.memory_space<vmem>>, vector<1x8x512xf32>
    %6 = vector.shape_cast %5 : vector<1x8x512xf32> to vector<8x512xf32>
    %7 = arith.truncf %3 : vector<8x128xf32> to vector<8x128xbf16>
    %c0_7 = arith.constant 0 : index
    %c0_8 = arith.constant 0 : index
    %8 = vector.load %arg2[%c0_7, %c0_8] : memref<128x512xbf16, #tpu.memory_space<vmem>>, vector<128x512xbf16>
    %cst = arith.constant dense<0.000000e+00> : vector<8x512xf32>
    %9 = tpu.matmul %7, %8, %cst {dimension_numbers = #tpu.dot_dimension_numbers<[1], [0], [0], [1], [0, 0, 1, 1], [], []>} : vector<8x128xbf16>, vector<128x512xbf16>, vector<8x512xf32> -> vector<8x512xf32>
    %10 = arith.addf %6, %9 : vector<8x512xf32>
    %11 = vector.extract_strided_slice %10 {offsets = [0, 0], sizes = [8, 128], strides = [1, 1]} : vector<8x512xf32> to vector<8x128xf32>
    %12 = arith.negf %11 : vector<8x128xf32>
    %13 = math.exp %12 : vector<8x128xf32>
    %cst_9 = arith.constant 1.000000e+00 : f32
    %14 = vector.broadcast %cst_9 : f32 to vector<8x128xf32>
    %15 = arith.addf %14, %13 : vector<8x128xf32>
    %16 = arith.divf %14, %15 : vector<8x128xf32>
    %17 = vector.extract_strided_slice %10 {offsets = [0, 128], sizes = [8, 128], strides = [1, 1]} : vector<8x512xf32> to vector<8x128xf32>
    %18 = arith.negf %17 : vector<8x128xf32>
    %19 = math.exp %18 : vector<8x128xf32>
    %cst_10 = arith.constant 1.000000e+00 : f32
    %20 = vector.broadcast %cst_10 : f32 to vector<8x128xf32>
    %21 = arith.addf %20, %19 : vector<8x128xf32>
    %22 = arith.divf %20, %21 : vector<8x128xf32>
    %23 = vector.extract_strided_slice %10 {offsets = [0, 256], sizes = [8, 128], strides = [1, 1]} : vector<8x512xf32> to vector<8x128xf32>
    %24 = math.tanh %23 : vector<8x128xf32>
    %25 = vector.extract_strided_slice %10 {offsets = [0, 384], sizes = [8, 128], strides = [1, 1]} : vector<8x512xf32> to vector<8x128xf32>
    %26 = arith.negf %25 : vector<8x128xf32>
    %27 = math.exp %26 : vector<8x128xf32>
    %cst_11 = arith.constant 1.000000e+00 : f32
    %28 = vector.broadcast %cst_11 : f32 to vector<8x128xf32>
    %29 = arith.addf %28, %27 : vector<8x128xf32>
    %30 = arith.divf %28, %29 : vector<8x128xf32>
    %31 = arith.mulf %22, %4 : vector<8x128xf32>
    %32 = arith.mulf %16, %24 : vector<8x128xf32>
    %33 = arith.addf %31, %32 : vector<8x128xf32>
    %34 = math.tanh %33 : vector<8x128xf32>
    %35 = arith.mulf %30, %34 : vector<8x128xf32>
    %c0_12 = arith.constant 0 : index
    %c0_13 = arith.constant 0 : index
    %36 = vector.load %arg5[%c0_12, %c0_13] : memref<8x128xf32, #tpu.memory_space<vmem>>, vector<8x128xf32>
    tpu.vector_store %arg5[%c0_12, %c0_13], %33 {strides = array<i32>} : memref<8x128xf32, #tpu.memory_space<vmem>>, vector<8x128xf32>,
    %c0_14 = arith.constant 0 : index
    %c0_15 = arith.constant 0 : index
    %37 = vector.load %arg4[%c0_14, %c0_15] : memref<8x128xf32, #tpu.memory_space<vmem>>, vector<8x128xf32>
    tpu.vector_store %arg4[%c0_14, %c0_15], %35 {strides = array<i32>} : memref<8x128xf32, #tpu.memory_space<vmem>>, vector<8x128xf32>,
    %38 = arith.truncf %35 : vector<8x128xf32> to vector<8x128xbf16>
    %c0_16 = arith.constant 0 : index
    %c0_17 = arith.constant 0 : index
    %c0_18 = arith.constant 0 : index
    %39 = vector.load %arg3[%c0_16, %c0_17, %c0_18] : memref<1x8x128xbf16, #tpu.memory_space<vmem>>, vector<1x8x128xbf16>
    %40 = vector.shape_cast %39 : vector<1x8x128xbf16> to vector<8x128xbf16>
    %41 = vector.shape_cast %38 : vector<8x128xbf16> to vector<1x8x128xbf16>
    tpu.vector_store %arg3[%c0_16, %c0_17, %c0_18], %41 {strides = array<i32>} : memref<1x8x128xbf16, #tpu.memory_space<vmem>>, vector<1x8x128xbf16>,
    return
  }
  func.func @transform_0(%arg0: i32) -> (i32, i32, i32) {
    %c0_i32 = arith.constant 0 : i32
    %c0_i32_0 = arith.constant 0 : i32
    %c0_i32_1 = arith.constant 0 : i32
    return %arg0, %c0_i32, %c0_i32_0 : i32, i32, i32
  }
  func.func @transform_1(%arg0: i32) -> (i32, i32) {
    %c0_i32 = arith.constant 0 : i32
    %c0_i32_0 = arith.constant 0 : i32
    %c0_i32_1 = arith.constant 0 : i32
    return %c0_i32, %c0_i32_0 : i32, i32
  }
  func.func @transform_2(%arg0: i32) -> (i32, i32, i32) {
    %c0_i32 = arith.constant 0 : i32
    %c0_i32_0 = arith.constant 0 : i32
    %c0_i32_1 = arith.constant 0 : i32
    return %arg0, %c0_i32, %c0_i32_0 : i32, i32, i32
  }
}

</mosaic_0001>

<llo_original>
// kernel: tpu_custom_call.1
$region0: #{tpu_custom_call.1}
  #allocation0 [shape = 'u32[]', space=smem, size = 0x4, offset = 0x4, fixed_abs, tag = 'smem constant byte address 0x4 - core index']
  #allocation1 [shape = 'u32[72,128]{1,0:T(1,128)}', space=vmem, size = 0x9000, scoped, tag = 'internal scratch']
  #allocation2 [shape = 'f32[8,128]{1,0:T(8,128)}', space=vmem, size = 0x1000, scoped, tag = 'scratch operand']
  #allocation3 [shape = 'f32[8,128]{1,0:T(8,128)}', space=vmem, size = 0x1000, scoped, tag = 'scratch operand']
  %s0 = inlined_call_operand.hbm [shape: f32[8,8,512], index: 0, kind: input, shape index: {}]
  %s1 = inlined_call_operand.hbm [shape: bf16[128,512], index: 1, kind: input, shape index: {}]
  %s2 = inlined_call_operand.hbm [shape: bf16[8,8,128], index: 2, kind: output, shape index: {}]
  %s3 = sld [smem:[#allocation0]]
  $region53: #{tpu_custom_call.1} parent=0
    _
  %s5 = ssub.s32 1, %s3
  %s6 = scalar_select 0, %s5, %s3
  $region1: #{tpu_custom_call.1} parent=0
    #allocation4 [shape = 'u8[32768]{0}', space=vmem, size = 0x8000, scoped, tag = 'input window, operand 0']
    #allocation5 [shape = 's32[2]{0}', space=sflag, size = 0x8, scoped, tag = 'scoped memory for tpu_custom_call.1']
    #allocation6 [shape = 's32[2]{0}', space=sflag, size = 0x8, scoped, tag = 'scoped memory for tpu_custom_call.1']
    #allocation7 [shape = 'u8[131072]{0}', space=vmem, size = 0x20000, scoped, tag = 'input window, operand 1, single buffered']
    #allocation8 [shape = 's32[1]{0}', space=sflag, size = 0x4, scoped, tag = 'scoped memory for tpu_custom_call.1']
    #allocation9 [shape = 'u8[4096]{0}', space=vmem, size = 0x1000, scoped, tag = 'output window, operand 0']
    %7 = vsyncpa [#allocation5], 0
    %s8 = scalar_lea.sflag [#allocation5], 1
    %9 = vsyncpa %s8, 0
    %10 = vsyncpa [#allocation8], 0
    %11 = vsyncpa [#allocation6], 0
    %s12 = scalar_lea.sflag [#allocation6], 1
    %13 = vsyncpa %s12, 0
    loop: start=0, step=1, limit=10
    $region2: #{tpu_custom_call.1} parent=1 // loop_pre_header
      _
    $region3: #{tpu_custom_call.1} parent=1 // loop_header
      %s15 = sphi 0, %s19
      %p16 = scmp.ge.s32.totalorder %s15, 10
      %s25 = sphi 0, %s27
      %s28 = sphi 0, %s25
      %s29 = sphi 0, %s28
      %s45 = sphi 0, %s29
      %s49 = sphi 0, %s49
      %s51 = sphi 0, %s49
      %s52 = sphi 0, %s51
      %s66 = sphi 0, %s52
      %s72 = sphi 0, %s74
      %s75 = sphi 0, %s72
      %s76 = sphi 0, %s75
      %s92 = sphi 0, %s76
    $region4: #{tpu_custom_call.1} parent=1 // loop_header_branch
      %18 = sbr.rel (%p16) target = $region8
    $region5: #{tpu_custom_call.1} parent=1 // loop_body
      %s20 = ssub.s32 %s15, 1
      %s21 = ssub.s32 %s15, 2
      %s22 = sadd.s32 %s15, 1
      %s23 = ssub.s32 %s15, %s22
      %p24 = scmp.eq.s32.totalorder %s23, 0
      %s26 = sadd.s32 %s25, 1
      %s27 = scalar_select %p24, %s25, %s26
      %p30 = pneg %p24
      %p31 = scmp.eq.s32.totalorder %s15, 7
      %p32 = por %p30, %p31
      %p33 = scmp.ne.s32.totalorder %s25, %s28
      %p34 = scmp.eq.s32.totalorder %s15, 0
      %p35 = por %p33, %p34
      %p36 = scmp.ne.s32.totalorder %s25, %s28
      %p37 = scmp.eq.s32.totalorder %s20, 7
      %p38 = por %p36, %p37
      %p39 = scmp.ne.s32.totalorder %s28, %s29
      %p40 = scmp.eq.s32.totalorder %s20, 0
      %p41 = por %p39, %p40
      %p42 = scmp.ne.s32.totalorder %s28, %s29
      %p43 = scmp.eq.s32.totalorder %s21, 7
      %p44 = por %p42, %p43
      %p46 = scmp.ne.s32.totalorder %s29, %s45
      %p47 = scmp.eq.s32.totalorder %s21, 0
      %p48 = por %p46, %p47
      %s50 = sadd.s32 %s49, 1
      %p53 = scmp.eq.s32.totalorder %s15, 7
      %p54 = scmp.ne.s32.totalorder %s49, %s51
      %p55 = scmp.eq.s32.totalorder %s15, 0
      %p56 = por %p54, %p55
      %p57 = scmp.ne.s32.totalorder %s49, %s51
      %p58 = scmp.eq.s32.totalorder %s20, 7
      %p59 = por %p57, %p58
      %p60 = scmp.ne.s32.totalorder %s51, %s52
      %p61 = scmp.eq.s32.totalorder %s20, 0
      %p62 = por %p60, %p61
      %p63 = scmp.ne.s32.totalorder %s51, %s52
      %p64 = scmp.eq.s32.totalorder %s21, 7
      %p65 = por %p63, %p64
      %p67 = scmp.ne.s32.totalorder %s52, %s66
      %p68 = scmp.eq.s32.totalorder %s21, 0
      %p69 = por %p67, %p68
      %s70 = ssub.s32 %s15, %s22
      %p71 = scmp.eq.s32.totalorder %s70, 0
      %s73 = sadd.s32 %s72, 1
      %s74 = scalar_select %p71, %s72, %s73
      %p77 = pneg %p71
      %p78 = scmp.eq.s32.totalorder %s15, 7
      %p79 = por %p77, %p78
      %p80 = scmp.ne.s32.totalorder %s72, %s75
      %p81 = scmp.eq.s32.totalorder %s15, 0
      %p82 = por %p80, %p81
      %p83 = scmp.ne.s32.totalorder %s72, %s75
      %p84 = scmp.eq.s32.totalorder %s20, 7
      %p85 = por %p83, %p84
      %p86 = scmp.ne.s32.totalorder %s75, %s76
      %p87 = scmp.eq.s32.totalorder %s20, 0
      %p88 = por %p86, %p87
      %p89 = scmp.ne.s32.totalorder %s75, %s76
      %p90 = scmp.eq.s32.totalorder %s21, 7
      %p91 = por %p89, %p90
      %p93 = scmp.ne.s32.totalorder %s76, %s92
      %p94 = scmp.eq.s32.totalorder %s21, 0
      %p95 = por %p93, %p94
      %p96 = scmp.le.s32.totalorder 1, %s15
      %p97 = scmp.lt.s32.totalorder %s15, 9
      %p98 = pnand %p96, %p97
      %p99 = pneg %p98
      // Predicated region
      $region9: #{tpu_custom_call.1} parent=5 // pred_check
        _
      $region10: #{tpu_custom_call.1} parent=5 // pred_check_branch
        %101 = sbr.rel (%p98) target = $region12
      $region11: #{tpu_custom_call.1} parent=5 // pred_region
        %s102 = ssub.s32 %s15, 1
        // Predicated region
        $region13: #{tpu_custom_call.1} parent=11 // pred_check
          %p103 = pneg %p62
        $region14: #{tpu_custom_call.1} parent=11 // pred_check_branch
          %105 = sbr.rel (%p103) target = $region16
        $region15: #{tpu_custom_call.1} parent=11 // pred_region
          %107 = vsyncadd [#allocation8], 0
          %s108 = sshll.u32 %s1, 4
          %s109 = int_to_ptr.hbm [resolvable:$true] %s108
          %s110 = sshll.u32 [#allocation7], 4
          %s111 = int_to_ptr.vmem [resolvable:$true] %s110
          %116 = dma.hbm_to_vmem [thread:$0]  %s109, 4096, %s111, [#allocation8], 256, 256, 16
        $region16: #{tpu_custom_call.1} parent=11 // pred_fallthru
          _
      $region12: #{tpu_custom_call.1} parent=5 // pred_fallthru
        _
      %p117 = scmp.lt.s32.totalorder %s15, 8
      // Predicated region
      $region17: #{tpu_custom_call.1} parent=5 // pred_check
        %p118 = pneg %p117
      $region18: #{tpu_custom_call.1} parent=5 // pred_check_branch
        %120 = sbr.rel (%p118) target = $region20
      $region19: #{tpu_custom_call.1} parent=5 // pred_region
        // Predicated region
        $region21: #{tpu_custom_call.1} parent=19 // pred_check
          %p121 = pneg %p35
        $region22: #{tpu_custom_call.1} parent=19 // pred_check_branch
          %123 = sbr.rel (%p121) target = $region24
        $region23: #{tpu_custom_call.1} parent=19 // pred_region
          %s124 = sand.u32 %s25, 1
          %s125 = scalar_lea.sflag [#allocation5], %s124
          %s126 = sand.u32 %s25, 1
          %s127 = smul.addr %s126, 32
          %s128 = scalar_lea.vmem [#allocation4], %s127
          %130 = vsyncadd %s125, 0
          %s131 = smul.addr %s15, 4
          %s132 = smul.addr %s131, 8
          %s133 = scalar_lea.hbm %s0, %s132
          %s135 = sshll.u32 %s133, 4
          %s136 = int_to_ptr.hbm [resolvable:$true] %s135
          %s137 = sshll.u32 %s128, 4
          %s138 = int_to_ptr.vmem [resolvable:$true] %s137
          %140 = dma.hbm_to_vmem [thread:$0]  %s136, 512, %s138, %s125
        $region24: #{tpu_custom_call.1} parent=19 // pred_fallthru
          _
      $region20: #{tpu_custom_call.1} parent=5 // pred_fallthru
        _
      %p141 = scmp.le.s32.totalorder 1, %s15
      %p142 = scmp.lt.s32.totalorder %s15, 9
      %p143 = pnand %p141, %p142
      %p144 = pneg %p143
      // Predicated region
      $region25: #{tpu_custom_call.1} parent=5 // pred_check
        _
      $region26: #{tpu_custom_call.1} parent=5 // pred_check_branch
        %146 = sbr.rel (%p143) target = $region28
      $region27: #{tpu_custom_call.1} parent=5 // pred_region
        %s147 = ssub.s32 %s15, 1
        %s148 = sand.u32 %s28, 1
        %s149 = scalar_lea.sflag [#allocation5], %s148
        %s150 = sand.u32 %s28, 1
        %s151 = smul.addr %s150, 32
        %s152 = scalar_lea.vmem [#allocation4], %s151
        // Predicated region
        $region29: #{tpu_custom_call.1} parent=27 // pred_check
          %p153 = pneg %p41
        $region30: #{tpu_custom_call.1} parent=27 // pred_check_branch
          %155 = sbr.rel (%p153) target = $region32
        $region31: #{tpu_custom_call.1} parent=27 // pred_region
          %157 = dma.done %s149, 512
        $region32: #{tpu_custom_call.1} parent=27 // pred_fallthru
          _
        // Predicated region
        $region33: #{tpu_custom_call.1} parent=27 // pred_check
          %p158 = pneg %p62
        $region34: #{tpu_custom_call.1} parent=27 // pred_check_branch
          %160 = sbr.rel (%p158) target = $region36
        $region35: #{tpu_custom_call.1} parent=27 // pred_region
          %162 = dma.done [#allocation8], 4096
        $region36: #{tpu_custom_call.1} parent=27 // pred_fallthru
          _
        %s163 = sand.u32 %s28, 1
        %s164 = scalar_lea.sflag [#allocation5], %s163
        %s165 = sand.u32 %s28, 1
        %s166 = smul.addr %s165, 32
        %s167 = scalar_lea.vmem [#allocation4], %s166
        %p168 = pneg %p41
        %p169 = pneg %p38
        %p170 = pneg %p62
        %p171 = pneg %p59
        %p172 = pneg %p88
        %p173 = pneg %p85
        %s174 = sand.u32 %s75, 1
        %s175 = scalar_lea.sflag [#allocation6], %s174
        %s176 = sand.u32 %s75, 1
        %s177 = smul.addr %s176, 4
        %s178 = scalar_lea.vmem [#allocation9], %s177
        %p179 = scmp.eq.s32.totalorder %s20, 0
        // Predicated region
        $region37: #{tpu_custom_call.1} parent=27 // pred_check
          %p180 = pneg %p179
        $region38: #{tpu_custom_call.1} parent=27 // pred_check_branch
          %182 = sbr.rel (%p180) target = $region40
        $region39: #{tpu_custom_call.1} parent=27 // pred_region
          %183 = vst [vmem:[#allocation2] sm:$0xff] 0.0
          %184 = vst [vmem:[#allocation3] sm:$0xff] 0.0
        $region40: #{tpu_custom_call.1} parent=27 // pred_fallthru
          _
        %v185 = vld [vmem:[#allocation2] sm:$0xff]
        %v186 = vld [vmem:[#allocation3] sm:$0xff]
        %v187 = vld [vmem:[%s152] sm:$0xff]
        %v188 = vld [vmem:[%s152 + $0x8] sm:$0xff]
        %v189 = vld [vmem:[%s152 + $0x10] sm:$0xff]
        %v190 = vld [vmem:[%s152 + $0x18] sm:$0xff]
        %v191 = vpack.c.bf16 %v185, %v185
        %v192 = vld [vmem:[#allocation7] sm:$0xff]
        %v193 = vld [vmem:[#allocation7 + $0x8] sm:$0xff]
        %v194 = vld [vmem:[#allocation7 + $0x10] sm:$0xff]
        %v195 = vld [vmem:[#allocation7 + $0x18] sm:$0xff]
        %v196 = vld [vmem:[#allocation7 + $0x20] sm:$0xff]
        %v197 = vld [vmem:[#allocation7 + $0x28] sm:$0xff]
        %v198 = vld [vmem:[#allocation7 + $0x30] sm:$0xff]
        %v199 = vld [vmem:[#allocation7 + $0x38] sm:$0xff]
        %v200 = vld [vmem:[#allocation7 + $0x40] sm:$0xff]
        %v201 = vld [vmem:[#allocation7 + $0x48] sm:$0xff]
        %v202 = vld [vmem:[#allocation7 + $0x50] sm:$0xff]
        %v203 = vld [vmem:[#allocation7 + $0x58] sm:$0xff]
        %v204 = vld [vmem:[#allocation7 + $0x60] sm:$0xff]
        %v205 = vld [vmem:[#allocation7 + $0x68] sm:$0xff]
        %v206 = vld [vmem:[#allocation7 + $0x70] sm:$0xff]
        %v207 = vld [vmem:[#allocation7 + $0x78] sm:$0xff]
        %v208 = vld [vmem:[#allocation7 + $0x80] sm:$0xff]
        %v209 = vld [vmem:[#allocation7 + $0x88] sm:$0xff]
        %v210 = vld [vmem:[#allocation7 + $0x90] sm:$0xff]
        %v211 = vld [vmem:[#allocation7 + $0x98] sm:$0xff]
        %v212 = vld [vmem:[#allocation7 + $0xa0] sm:$0xff]
        %v213 = vld [vmem:[#allocation7 + $0xa8] sm:$0xff]
        %v214 = vld [vmem:[#allocation7 + $0xb0] sm:$0xff]
        %v215 = vld [vmem:[#allocation7 + $0xb8] sm:$0xff]
        %v216 = vld [vmem:[#allocation7 + $0xc0] sm:$0xff]
        %v217 = vld [vmem:[#allocation7 + $0xc8] sm:$0xff]
        %v218 = vld [vmem:[#allocation7 + $0xd0] sm:$0xff]
        %v219 = vld [vmem:[#allocation7 + $0xd8] sm:$0xff]
        %v220 = vld [vmem:[#allocation7 + $0xe0] sm:$0xff]
        %v221 = vld [vmem:[#allocation7 + $0xe8] sm:$0xff]
        %v222 = vld [vmem:[#allocation7 + $0xf0] sm:$0xff]
        %v223 = vld [vmem:[#allocation7 + $0xf8] sm:$0xff]
        %v256 = vunpack.c.l.b16 %v192
        %v257 = vunpack.c.h.b16 %v192
        %v258 = vunpack.c.l.b16 %v193
        %v259 = vunpack.c.h.b16 %v193
        %v260 = vunpack.c.l.b16 %v194
        %v261 = vunpack.c.h.b16 %v194
        %v262 = vunpack.c.l.b16 %v195
        %v263 = vunpack.c.h.b16 %v195
        %v264 = vunpack.c.l.b16 %v196
        %v265 = vunpack.c.h.b16 %v196
        %v266 = vunpack.c.l.b16 %v197
        %v267 = vunpack.c.h.b16 %v197
        %v268 = vunpack.c.l.b16 %v198
        %v269 = vunpack.c.h.b16 %v198
        %v270 = vunpack.c.l.b16 %v199
        %v271 = vunpack.c.h.b16 %v199
        %v272 = vunpack.c.l.b16 %v200
        %v273 = vunpack.c.h.b16 %v200
        %v274 = vunpack.c.l.b16 %v201
        %v275 = vunpack.c.h.b16 %v201
        %v276 = vunpack.c.l.b16 %v202
        %v277 = vunpack.c.h.b16 %v202
        %v278 = vunpack.c.l.b16 %v203
        %v279 = vunpack.c.h.b16 %v203
        %v280 = vunpack.c.l.b16 %v204
        %v281 = vunpack.c.h.b16 %v204
        %v282 = vunpack.c.l.b16 %v205
        %v283 = vunpack.c.h.b16 %v205
        %v284 = vunpack.c.l.b16 %v206
        %v285 = vunpack.c.h.b16 %v206
        %v286 = vunpack.c.l.b16 %v207
        %v287 = vunpack.c.h.b16 %v207
        %v288 = vunpack.c.l.b16 %v208
        %v289 = vunpack.c.h.b16 %v208
        %v290 = vunpack.c.l.b16 %v209
        %v291 = vunpack.c.h.b16 %v209
        %v292 = vunpack.c.l.b16 %v210
        %v293 = vunpack.c.h.b16 %v210
        %v294 = vunpack.c.l.b16 %v211
        %v295 = vunpack.c.h.b16 %v211
        %v296 = vunpack.c.l.b16 %v212
        %v297 = vunpack.c.h.b16 %v212
        %v298 = vunpack.c.l.b16 %v213
        %v299 = vunpack.c.h.b16 %v213
        %v300 = vunpack.c.l.b16 %v214
        %v301 = vunpack.c.h.b16 %v214
        %v302 = vunpack.c.l.b16 %v215
        %v303 = vunpack.c.h.b16 %v215
        %v304 = vunpack.c.l.b16 %v216
        %v305 = vunpack.c.h.b16 %v216
        %v306 = vunpack.c.l.b16 %v217
        %v307 = vunpack.c.h.b16 %v217
        %v308 = vunpack.c.l.b16 %v218
        %v309 = vunpack.c.h.b16 %v218
        %v310 = vunpack.c.l.b16 %v219
        %v311 = vunpack.c.h.b16 %v219
        %v312 = vunpack.c.l.b16 %v220
        %v313 = vunpack.c.h.b16 %v220
        %v314 = vunpack.c.l.b16 %v221
        %v315 = vunpack.c.h.b16 %v221
        %v316 = vunpack.c.l.b16 %v222
        %v317 = vunpack.c.h.b16 %v222
        %v318 = vunpack.c.l.b16 %v223
        %v319 = vunpack.c.h.b16 %v223
        %v320 = vpack.c.b16 %v260, %v256
        %v321 = vpack.c.b16 %v261, %v257
        %v322 = vpack.c.b16 %v262, %v258
        %v323 = vpack.c.b16 %v263, %v259
        %v324 = vpack.c.b16 %v268, %v264
        %v325 = vpack.c.b16 %v269, %v265
        %v326 = vpack.c.b16 %v270, %v266
        %v327 = vpack.c.b16 %v271, %v267
        %v328 = vpack.c.b16 %v276, %v272
        %v329 = vpack.c.b16 %v277, %v273
        %v330 = vpack.c.b16 %v278, %v274
        %v331 = vpack.c.b16 %v279, %v275
        %v332 = vpack.c.b16 %v284, %v280
        %v333 = vpack.c.b16 %v285, %v281
        %v334 = vpack.c.b16 %v286, %v282
        %v335 = vpack.c.b16 %v287, %v283
        %v336 = vpack.c.b16 %v292, %v288
        %v337 = vpack.c.b16 %v293, %v289
        %v338 = vpack.c.b16 %v294, %v290
        %v339 = vpack.c.b16 %v295, %v291
        %v340 = vpack.c.b16 %v300, %v296
        %v341 = vpack.c.b16 %v301, %v297
        %v342 = vpack.c.b16 %v302, %v298
        %v343 = vpack.c.b16 %v303, %v299
        %v344 = vpack.c.b16 %v308, %v304
        %v345 = vpack.c.b16 %v309, %v305
        %v346 = vpack.c.b16 %v310, %v306
        %v347 = vpack.c.b16 %v311, %v307
        %v348 = vpack.c.b16 %v316, %v312
        %v349 = vpack.c.b16 %v317, %v313
        %v350 = vpack.c.b16 %v318, %v314
        %v351 = vpack.c.b16 %v319, %v315
        %384 = vmatpush.bf16.msra.mxu0 %v348
        %385 = vmatpush.bf16.msra.mxu0 %v344
        %386 = vmatpush.bf16.msra.mxu0 %v340
        %387 = vmatpush.bf16.msra.mxu0 %v336
        %388 = vmatpush.bf16.msra.mxu0 %v332
        %389 = vmatpush.bf16.msra.mxu0 %v328
        %390 = vmatpush.bf16.msra.mxu0 %v324
        %391 = vmatpush.bf16.msra.mxu0 %v320
        %392 = vmatmul.bf16.gmra.mxu0 %v191
        %v393 = vpop.f32.mrf.mxu0
        %v394 = vadd.f32 0.0, %v393
        %v395 = vpop.f32.mrf.mxu0
        %396 = vdwg.mxu0
        %397 = vmatpush.bf16.msra.mxu0 %v349
        %398 = vmatpush.bf16.msra.mxu0 %v345
        %399 = vmatpush.bf16.msra.mxu0 %v341
        %400 = vmatpush.bf16.msra.mxu0 %v337
        %401 = vmatpush.bf16.msra.mxu0 %v333
        %402 = vmatpush.bf16.msra.mxu0 %v329
        %403 = vmatpush.bf16.msra.mxu0 %v325
        %404 = vmatpush.bf16.msra.mxu0 %v321
        %405 = vmatmul.bf16.gmra.mxu0 %v191
        %v406 = vpop.f32.mrf.mxu0
        %v407 = vadd.f32 0.0, %v406
        %v408 = vpop.f32.mrf.mxu0
        %409 = vdwg.mxu0
        %410 = vmatpush.bf16.msra.mxu0 %v350
        %411 = vmatpush.bf16.msra.mxu0 %v346
        %412 = vmatpush.bf16.msra.mxu0 %v342
        %413 = vmatpush.bf16.msra.mxu0 %v338
        %414 = vmatpush.bf16.msra.mxu0 %v334
        %415 = vmatpush.bf16.msra.mxu0 %v330
        %416 = vmatpush.bf16.msra.mxu0 %v326
        %417 = vmatpush.bf16.msra.mxu0 %v322
        %418 = vmatmul.bf16.gmra.mxu0 %v191
        %v419 = vpop.f32.mrf.mxu0
        %v420 = vadd.f32 0.0, %v419
        %v421 = vpop.f32.mrf.mxu0
        %422 = vdwg.mxu0
        %423 = vmatpush.bf16.msra.mxu0 %v351
        %424 = vmatpush.bf16.msra.mxu0 %v347
        %425 = vmatpush.bf16.msra.mxu0 %v343
        %426 = vmatpush.bf16.msra.mxu0 %v339
        %427 = vmatpush.bf16.msra.mxu0 %v335
        %428 = vmatpush.bf16.msra.mxu0 %v331
        %429 = vmatpush.bf16.msra.mxu0 %v327
        %430 = vmatpush.bf16.msra.mxu0 %v323
        %431 = vmatmul.bf16.gmra.mxu0 %v191
        %v432 = vpop.f32.mrf.mxu0
        %v433 = vadd.f32 0.0, %v432
        %v434 = vpop.f32.mrf.mxu0
        %435 = vdwg.mxu0
        %v436 = vadd.f32 %v187, %v394
        %v437 = vadd.f32 %v188, %v407
        %v438 = vadd.f32 %v189, %v420
        %v439 = vadd.f32 %v190, %v433
        %v440 = vxor.u32 %v436, 2147483648
        %v441 = vmul.f32 %v440, 1.442695
        %v442 = vpow.pop %v441
        %v443 = vadd.f32 %v442, 1.0
        %v444 = vrcp.pop %v443
        %v445 = vmul.f32 %v443, %v444
        %v446 = vsub.f32 1.0, %v445
        %v447 = vmul.f32 %v444, %v446
        %v448 = vadd.f32 %v444, %v447
        %vm449 = vweird.f32 %v443
        %vm450 = vweird.f32 %v444
        %vm451 = vmor %vm449, %vm450
        %v452 = vsel %vm451, %v444, %v448
        %v453 = vand.u32 2147483647, %v443
        %vm454 = vcmp.eq.f32.partialorder %v453, 8.507059e+37
        %v455 = vand.u32 %v443, 2147483648
        %v456 = vor.u32 1.1754944e-38, %v455
        %v457 = vsel %vm454, %v456, %v452
        %v458 = vmul.f32 1.0, %v457
        %v459 = vxor.u32 %v437, 2147483648
        %v460 = vmul.f32 %v459, 1.442695
        %v461 = vpow.pop %v460
        %v462 = vadd.f32 %v461, 1.0
        %v463 = vrcp.pop %v462
        %v464 = vmul.f32 %v462, %v463
        %v465 = vsub.f32 1.0, %v464
        %v466 = vmul.f32 %v463, %v465
        %v467 = vadd.f32 %v463, %v466
        %vm468 = vweird.f32 %v462
        %vm469 = vweird.f32 %v463
        %vm470 = vmor %vm468, %vm469
        %v471 = vsel %vm470, %v463, %v467
        %v472 = vand.u32 2147483647, %v462
        %vm473 = vcmp.eq.f32.partialorder %v472, 8.507059e+37
        %v474 = vand.u32 %v462, 2147483648
        %v475 = vor.u32 1.1754944e-38, %v474
        %v476 = vsel %vm473, %v475, %v471
        %v477 = vmul.f32 1.0, %v476
        %v478 = vtanh.pop %v438
        %v479 = vxor.u32 %v439, 2147483648
        %v480 = vmul.f32 %v479, 1.442695
        %v481 = vpow.pop %v480
        %v482 = vadd.f32 %v481, 1.0
        %v483 = vrcp.pop %v482
        %v484 = vmul.f32 %v482, %v483
        %v485 = vsub.f32 1.0, %v484
        %v486 = vmul.f32 %v483, %v485
        %v487 = vadd.f32 %v483, %v486
        %vm488 = vweird.f32 %v482
        %vm489 = vweird.f32 %v483
        %vm490 = vmor %vm488, %vm489
        %v491 = vsel %vm490, %v483, %v487
        %v492 = vand.u32 2147483647, %v482
        %vm493 = vcmp.eq.f32.partialorder %v492, 8.507059e+37
        %v494 = vand.u32 %v482, 2147483648
        %v495 = vor.u32 1.1754944e-38, %v494
        %v496 = vsel %vm493, %v495, %v491
        %v497 = vmul.f32 1.0, %v496
        %v498 = vmul.f32 %v477, %v186
        %v499 = vmul.f32 %v458, %v478
        %v500 = vadd.f32 %v498, %v499
        %v501 = vtanh.pop %v500
        %v502 = vmul.f32 %v497, %v501
        %503 = vst [vmem:[#allocation3] sm:$0xff] %v500
        %504 = vst [vmem:[#allocation2] sm:$0xff] %v502
        %v505 = vpack.c.bf16 %v502, %v502
        %506 = vst [vmem:[%s178] sm:$0xf] %v505
        %s507 = sand.u32 %s75, 1
        %s508 = scalar_lea.sflag [#allocation6], %s507
        %s509 = sand.u32 %s75, 1
        %s510 = smul.addr %s509, 4
        %s511 = scalar_lea.vmem [#allocation9], %s510
        // Predicated region
        $region41: #{tpu_custom_call.1} parent=27 // pred_check
          %p512 = pneg %p85
        $region42: #{tpu_custom_call.1} parent=27 // pred_check_branch
          %514 = sbr.rel (%p512) target = $region44
        $region43: #{tpu_custom_call.1} parent=27 // pred_region
          %516 = vsyncadd %s508, 0
          %s517 = smul.addr %s20, 4
          %s518 = scalar_lea.hbm %s2, %s517
          %s520 = sshll.u32 %s511, 4
          %s521 = int_to_ptr.vmem [resolvable:$true] %s520
          %s522 = sshll.u32 %s518, 4
          %s523 = int_to_ptr.hbm [resolvable:$true] %s522
          %525 = dma.vmem_to_hbm [thread:$0]  %s521, 64, %s523, %s508
        $region44: #{tpu_custom_call.1} parent=27 // pred_fallthru
          _
      $region28: #{tpu_custom_call.1} parent=5 // pred_fallthru
        _
      %p526 = scmp.le.s32.totalorder 2, %s15
      // Predicated region
      $region45: #{tpu_custom_call.1} parent=5 // pred_check
        %p527 = pneg %p526
      $region46: #{tpu_custom_call.1} parent=5 // pred_check_branch
        %529 = sbr.rel (%p527) target = $region48
      $region47: #{tpu_custom_call.1} parent=5 // pred_region
        %s530 = ssub.s32 %s15, 2
        // Predicated region
        $region49: #{tpu_custom_call.1} parent=47 // pred_check
          %p531 = pneg %p91
        $region50: #{tpu_custom_call.1} parent=47 // pred_check_branch
          %533 = sbr.rel (%p531) target = $region52
        $region51: #{tpu_custom_call.1} parent=47 // pred_region
          %s534 = sand.u32 %s76, 1
          %s535 = scalar_lea.sflag [#allocation6], %s534
          %s536 = sand.u32 %s76, 1
          %s537 = smul.addr %s536, 4
          %s538 = scalar_lea.vmem [#allocation9], %s537
          %540 = dma.done %s535, 64
        $region52: #{tpu_custom_call.1} parent=47 // pred_fallthru
          _
      $region48: #{tpu_custom_call.1} parent=5 // pred_fallthru
        _
    $region6: #{tpu_custom_call.1} parent=1 // loop_footer
      %s19 = sadd.s32 1, %s15
    $region7: #{tpu_custom_call.1} parent=1 // loop_footer_branch
      %14 = sbr.rel target = $region3
    $region8: #{tpu_custom_call.1} parent=1 // loop_exit
      _
    %541 = vsyncpa [#allocation5], 1
    %s542 = scalar_lea.sflag [#allocation5], 1
    %543 = vsyncpa %s542, 1
    %544 = vsyncpa [#allocation8], 1
    %545 = vsyncpa [#allocation6], 1
    %s546 = scalar_lea.sflag [#allocation6], 1
    %547 = vsyncpa %s546, 1

</llo_original>
